<compile_context>
chip_gen: v7x
topology: tpu7x:2x2x1
jax: 0.10.0
libtpu: 0.0.40
codegen_flags: <defaults>
</compile_context>

<pallas_src>
import functools
import math

import jax
import jax.numpy as jnp
from jax.experimental import pallas as pl
from jax.experimental.pallas import tpu as pltpu

LANE = 128


def _cdiv(a: int, b: int) -> int:
    return (a + b - 1) // b


def _round_up(a: int, b: int) -> int:
    return _cdiv(a, b) * b


def _vmem_capacity_bytes() -> int:
    try:
        info = pltpu.get_tpu_info()
        cap = int(getattr(info, "vmem_capacity_bytes", 0))
        if cap > 0:
            return cap
    except Exception:
        pass
    return 64 * 1024 * 1024  # conservative (v7x per-TensorCore size)


# --------------------------------------------------------------------------
# Kernels
# --------------------------------------------------------------------------
def _conv1d_k1_kernel(w_ref, b_ref, x_ref, o_ref):
    """K == 1: plain (C_out, C_in) @ (C_in, T) per tile, no halo, no scratch."""
    acc = jnp.dot(w_ref[...], x_ref[...], preferred_element_type=jnp.float32)
    o_ref[...] = (acc + b_ref[...]).astype(o_ref.dtype)


def _conv1d_tap_kernel(w_ref, b_ref, x_ref, xh_ref, o_ref, xb_ref, *, K, halo):
    """Per-tap MXU dots (deep C_in).

    w_ref : (K, C_out, C_in)  VMEM resident
    b_ref : (C_out, 1) f32    VMEM resident
    x_ref : (C_in, T)         current tile
    xh_ref: (C_in, halo)      head of the next tile (right halo)
    o_ref : (C_out, T)
    xb_ref: (C_in, 2*halo)    scratch: boundary window only
    """
    T = x_ref.shape[1]
    t_main = T - halo

    # Boundary window: last `halo` cols of this tile + head of the next tile.
    # Only 2*halo lanes of VMEM plumbing per step (not the whole tile).
    xb_ref[:, :halo] = x_ref[:, t_main:]
    xb_ref[:, halo:] = xh_ref[...]

    bias = b_ref[...]

    if t_main > 0:
        # Main region: every shifted tap view stays inside x_ref -> slice the
        # ref directly (no materialized window value, no full-tile copy).
        acc = jnp.dot(w_ref[0], x_ref[:, 0:t_main],
                      preferred_element_type=jnp.float32)
        for k in range(1, K):
            acc = acc + jnp.dot(w_ref[k], x_ref[:, k:k + t_main],
                                preferred_element_type=jnp.float32)
        o_ref[:, :t_main] = (acc + bias).astype(o_ref.dtype)

    # Boundary region (last `halo` output columns of the tile).
    acc_b = jnp.dot(w_ref[0], xb_ref[:, 0:halo],
                    preferred_element_type=jnp.float32)
    for k in range(1, K):
        acc_b = acc_b + jnp.dot(w_ref[k], xb_ref[:, k:k + halo],
                                preferred_element_type=jnp.float32)
    o_ref[:, t_main:] = (acc_b + bias).astype(o_ref.dtype)


def _conv1d_fused_kernel(w_ref, b_ref, x_ref, xh_ref, o_ref, xb_ref, xs_ref,
                         *, K, halo, c_in, c_in_pad):
    """Single im2col dot (shallow K*C_in).

    w_ref : (C_out, K*c_in_pad)  VMEM resident (pad columns are zero)
    x_ref : (c_in, T), xh_ref: (c_in, halo), o_ref: (C_out, T)
    xb_ref: (c_in, 2*halo)  scratch boundary window
    xs_ref: (K*c_in_pad, T) scratch im2col stack
    """
    T = x_ref.shape[1]
    t_main = T - halo

    xb_ref[:, :halo] = x_ref[:, t_main:]
    xb_ref[:, halo:] = xh_ref[...]

    for k in range(K):
        r = k * c_in_pad
        if t_main > 0:
            xs_ref[r:r + c_in, :t_main] = x_ref[:, k:k + t_main]
        xs_ref[r:r + c_in, t_main:] = xb_ref[:, k:k + halo]
        if c_in_pad > c_in:
            # Keep pad rows at exact zero (their weight columns are zero too),
            # so tiny C_in gets full sublane-pack alignment without padding x.
            xs_ref[r + c_in:r + c_in_pad, :] = jnp.zeros(
                (c_in_pad - c_in, T), dtype=xs_ref.dtype)

    acc = jnp.dot(w_ref[...], xs_ref[...], preferred_element_type=jnp.float32)
    o_ref[...] = (acc + b_ref[...]).astype(o_ref.dtype)


# --------------------------------------------------------------------------
# Wrapper
# --------------------------------------------------------------------------
@functools.partial(jax.jit, static_argnames=("tile_l",))
def norm_conv1d(x, weight, bias, *, tile_l=None):
    """NormConv1d(norm='none').forward(x) == Conv1d(stride=1, padding=0)(x).

    x: (N, C_in, L), weight: (C_out, C_in, K), bias: (C_out,)
    returns: (N, C_out, L - K + 1)
    """
    # TODO(synk): norm='weight_norm'/'layer_norm'/'time_group_norm' and
    # non-default Conv1d kwargs (stride/padding/dilation/groups) are not
    # implemented; the default NormConv1d (norm='none') is exactly this conv.
    N, C_in, L = x.shape
    C_out, C_in_w, K = weight.shape
    assert C_in == C_in_w, "groups != 1 not supported"
    L_out = L - K + 1
    assert L_out >= 1, "input shorter than kernel"

    itemsize = x.dtype.itemsize
    pack = max(1, 32 // max(1, itemsize))        # 8 f32 / 16 bf16 / 32 int8
    halo = _round_up(K - 1, LANE) if K > 1 else 0
    unit = halo if K > 1 else LANE

    # ----- compute-path selection: match contraction depth to the MXU -----
    c_in_pad = _round_up(C_in, pack)
    fuse_k = (K > 1) and (K * c_in_pad <= 256)

    vmem_cap = _vmem_capacity_bytes()

    # Resident (constant index_map) blocks; assume double buffering.
    if K == 1:
        w_elems = C_out * C_in
    elif fuse_k:
        w_elems = C_out * K * c_in_pad
    else:
        w_elems = K * C_out * C_in
    resident = 2 * (w_elems * itemsize + C_out * 4)

    def footprint(t):
        f = 2 * C_in * t * itemsize              # x tile (double buffered)
        f += 2 * C_out * t * itemsize            # out tile (double buffered)
        f += 2 * C_out * t * 4                   # f32 accumulation temporaries
        if K > 1:
            f += 2 * C_in * halo * itemsize      # halo block (double buffered)
            f += C_in * 2 * halo * itemsize      # xb scratch
        if fuse_k:
            f += K * c_in_pad * t * itemsize     # im2col scratch
        return f

    # ----- tile length -----
    if L_out >= unit:
        max_tile = (L_out // unit) * unit        # block never exceeds array dims
        pad_tail = False
    else:
        max_tile = unit                          # tiny input: minimal pad below
        pad_tail = True

    if tile_l is not None:
        t = max(unit, (int(tile_l) // unit) * unit)
        t = min(t, max_tile)
    else:
        budget = max(4 << 20, int(0.45 * vmem_cap) - resident)
        cap = min(max(2048, unit), max_tile)
        t, cand = unit, unit
        while cand <= cap:
            if footprint(cand) <= budget:
                t = cand
            cand += unit
        # Keep enough grid steps to feed both v7x TensorCores / the pipeline.
        while N * _cdiv(L_out, t) < 8 and t > unit:
            t -= unit
    tile = t

    # ----- input / output layout (avoid full HBM pad+slice round trips) -----
    if pad_tail:
        out_len = tile                           # == unit (tiny inputs only)
        x_len = out_len + halo
        x_in = jnp.pad(x, ((0, 0), (0, 0), (0, x_len - L)))
    else:
        out_len = L_out
        x_len = L
        x_in = x
    num_tiles = _cdiv(out_len, tile)

    # ----- weights / bias (cast once in the wrapper) -----
    w = weight.astype(x.dtype)
    b2 = bias.astype(jnp.float32).reshape(C_out, 1)

    if K == 1:
        w2 = w.reshape(C_out, C_in)
        w_spec = pl.BlockSpec((C_out, C_in), lambda n, l: (0, 0))
    elif fuse_k:
        w_t = jnp.transpose(w, (0, 2, 1))        # (C_out, K, C_in)
        if c_in_pad > C_in:
            w_t = jnp.pad(w_t, ((0, 0), (0, 0), (0, c_in_pad - C_in)))
        w2 = w_t.reshape(C_out, K * c_in_pad)
        w_spec = pl.BlockSpec((C_out, K * c_in_pad), lambda n, l: (0, 0))
    else:
        w2 = jnp.transpose(w, (2, 0, 1))         # (K, C_out, C_in)
        w_spec = pl.BlockSpec((K, C_out, C_in), lambda n, l: (0, 0, 0))

    b_spec = pl.BlockSpec((C_out, 1), lambda n, l: (0, 0))
    x_spec = pl.BlockSpec((None, C_in, tile), lambda n, l: (n, 0, l))
    out_spec = pl.BlockSpec((None, C_out, tile), lambda n, l: (n, 0, l))

    if K == 1:
        kernel = _conv1d_k1_kernel
        in_specs = [w_spec, b_spec, x_spec]
        scratch = ()
        operands = (w2, b2, x_in)
    else:
        halo_stride = tile // halo
        last_halo_block = _cdiv(x_len, halo) - 1
        halo_spec = pl.BlockSpec(
            (None, C_in, halo),
            lambda n, l: (n, 0,
                          jnp.minimum((l + 1) * halo_stride, last_halo_block)))
        in_specs = [w_spec, b_spec, x_spec, halo_spec]
        operands = (w2, b2, x_in, x_in)
        if fuse_k:
            kernel = functools.partial(_conv1d_fused_kernel, K=K, halo=halo,
                                       c_in=C_in, c_in_pad=c_in_pad)
            scratch = (pltpu.VMEM((C_in, 2 * halo), x.dtype),
                       pltpu.VMEM((K * c_in_pad, tile), x.dtype))
        else:
            kernel = functools.partial(_conv1d_tap_kernel, K=K, halo=halo)
            scratch = (pltpu.VMEM((C_in, 2 * halo), x.dtype),)

    cost = pl.CostEstimate(
        flops=2 * N * C_out * C_in * K * L_out,
        transcendentals=0,
        bytes_accessed=int(x.size * itemsize + w2.size * itemsize
                           + b2.size * 4 + N * C_out * L_out * itemsize))

    vmem_limit = int(1.5 * (footprint(tile) + resident)) + (8 << 20)
    vmem_limit = max(16 << 20, min(vmem_limit, int(0.9 * vmem_cap)))

    out = pl.pallas_call(
        kernel,
        out_shape=jax.ShapeDtypeStruct((N, C_out, out_len), x.dtype),
        grid_spec=pltpu.PrefetchScalarGridSpec(
            num_scalar_prefetch=0,
            grid=(N, num_tiles),
            in_specs=in_specs,
            out_specs=out_spec,
            scratch_shapes=scratch),
        compiler_params=pltpu.CompilerParams(
            dimension_semantics=("parallel", "parallel"),
            vmem_limit_bytes=vmem_limit),
        cost_estimate=cost,
    )(*operands)

    if pad_tail:
        out = out[:, :, :L_out]
    return out


# --------------------------------------------------------------------------
# Self-test
# --------------------------------------------------------------------------
if __name__ == "__main__":
    def reference(x, w, b):
        return jax.lax.conv_general_dilated(
            x, w, window_strides=(1,), padding="VALID",
            dimension_numbers=("NCH", "OIH", "NCH"),
            precision=jax.lax.Precision.HIGHEST) + b.reshape(1, -1, 1)

    def make_case(key, N, C_in, C_out, K, L):
        k1, k2, k3 = jax.random.split(key, 3)
        bound = 1.0 / math.sqrt(C_in * K)
        # Quantize to the bf16 grid so MXU pass decomposition is exact and the
        # comparison below is precision-regime independent.
        x = jax.random.normal(k1, (N, C_in, L), dtype=jnp.float32)
        w = jax.random.uniform(k2, (C_out, C_in, K), minval=-bound,
                               maxval=bound, dtype=jnp.float32)
        b = jax.random.uniform(k3, (C_out,), minval=-bound, maxval=bound,
                               dtype=jnp.float32)
        q = lambda a: a.astype(jnp.bfloat16).astype(jnp.float32)
        return q(x), q(w), q(b)

    cases = [
        # (shapes, tile_l)
        (dict(N=2, C_in=4, C_out=8, K=3, L=16), None),    # fused + C_in pad, tiny-input path
        (dict(N=1, C_in=8, C_out=16, K=5, L=300), 256),   # fused, 2 tiles, halo crossing
        (dict(N=1, C_in=64, C_out=32, K=7, L=300), 256),  # per-tap path, 2 tiles
        (dict(N=1, C_in=8, C_out=8, K=1, L=200), None),   # K == 1 fast path
    ]

    key = jax.random.PRNGKey(0)
    keys = jax.random.split(key, len(cases))
    for case_key, (shp, tl) in zip(keys, cases):
        x, w, b = make_case(case_key, **shp)
        out = jax.block_until_ready(norm_conv1d(x, w, b, tile_l=tl))
        ref = reference(x, w, b)
        assert out.shape == ref.shape, (out.shape, ref.shape)
        max_err = float(jnp.max(jnp.abs(out - ref)))
        assert jnp.allclose(out, ref, atol=1e-3, rtol=1e-3), (shp, max_err)

    print("KERNEL_OK")
</pallas_src>

<mosaic_0001>
module attributes {stable_mosaic.version = 11 : i64} {
  func.func @_conv1d_fused_kernel(%arg0: i32, %arg1: i32, %arg2: memref<8x24xf32, #tpu.memory_space<vmem>>, %arg3: memref<8x1xf32, #tpu.memory_space<vmem>>, %arg4: memref<1x4x128xf32, #tpu.memory_space<vmem>>, %arg5: memref<1x4x128xf32, #tpu.memory_space<vmem>>, %arg6: memref<1x8x128xf32, #tpu.memory_space<vmem>>, %arg7: memref<4x256xf32, #tpu.memory_space<vmem>>, %arg8: memref<24x128xf32, #tpu.memory_space<vmem>>) attributes {dimension_semantics = [#tpu.dimension_semantics<parallel>, #tpu.dimension_semantics<parallel>], iteration_bounds = array<i64: 2, 1>, scalar_prefetch = 0 : i64, scratch_operands = 2 : i64, tpu.core_type = #tpu.core_type<tc>, window_params = [{pipeline_mode = #tpu.pipeline_mode<synchronous>, transform_indices = @transform_0, window_bounds = array<i64: 8, 24>}, {pipeline_mode = #tpu.pipeline_mode<synchronous>, transform_indices = @transform_1, window_bounds = array<i64: 8, 1>}, {transform_indices = @transform_2, window_bounds = array<i64: 1, 4, 128>}, {transform_indices = @transform_3, window_bounds = array<i64: 1, 4, 128>}, {transform_indices = @transform_4, window_bounds = array<i64: 1, 8, 128>}]} {
    %c0 = arith.constant 0 : index
    %c0_0 = arith.constant 0 : index
    %c0_1 = arith.constant 0 : index
    %0 = vector.load %arg4[%c0, %c0_0, %c0_1] : memref<1x4x128xf32, #tpu.memory_space<vmem>>, vector<1x4x128xf32>
    %1 = vector.shape_cast %0 : vector<1x4x128xf32> to vector<4x128xf32>
    %c0_2 = arith.constant 0 : index
    %c0_3 = arith.constant 0 : index
    %2 = vector.load %arg7[%c0_2, %c0_3] : memref<4x256xf32, #tpu.memory_space<vmem>>, vector<4x128xf32>
    tpu.vector_store %arg7[%c0_2, %c0_3], %1 {strides = array<i32>} : memref<4x256xf32, #tpu.memory_space<vmem>>, vector<4x128xf32>,
    %c0_4 = arith.constant 0 : index
    %c0_5 = arith.constant 0 : index
    %c0_6 = arith.constant 0 : index
    %3 = vector.load %arg5[%c0_4, %c0_5, %c0_6] : memref<1x4x128xf32, #tpu.memory_space<vmem>>, vector<1x4x128xf32>
    %4 = vector.shape_cast %3 : vector<1x4x128xf32> to vector<4x128xf32>
    %c0_7 = arith.constant 0 : index
    %c128 = arith.constant 128 : index
    %5 = vector.load %arg7[%c0_7, %c128] : memref<4x256xf32, #tpu.memory_space<vmem>>, vector<4x128xf32>
    tpu.vector_store %arg7[%c0_7, %c128], %4 {strides = array<i32>} : memref<4x256xf32, #tpu.memory_space<vmem>>, vector<4x128xf32>,
    %c0_8 = arith.constant 0 : index
    %c0_9 = arith.constant 0 : index
    %6 = vector.load %arg7[%c0_8, %c0_9] : memref<4x256xf32, #tpu.memory_space<vmem>>, vector<4x128xf32>
    %c0_10 = arith.constant 0 : index
    %c0_11 = arith.constant 0 : index
    %7 = vector.load %arg8[%c0_10, %c0_11] : memref<24x128xf32, #tpu.memory_space<vmem>>, vector<4x128xf32>
    tpu.vector_store %arg8[%c0_10, %c0_11], %6 {strides = array<i32>} : memref<24x128xf32, #tpu.memory_space<vmem>>, vector<4x128xf32>,
    %cst = arith.constant 0.000000e+00 : f32
    %8 = vector.broadcast %cst : f32 to vector<4x128xf32>
    %c4 = arith.constant 4 : index
    %c0_12 = arith.constant 0 : index
    %9 = vector.load %arg8[%c4, %c0_12] : memref<24x128xf32, #tpu.memory_space<vmem>>, vector<4x128xf32>
    tpu.vector_store %arg8[%c4, %c0_12], %8 {strides = array<i32>} : memref<24x128xf32, #tpu.memory_space<vmem>>, vector<4x128xf32>,
    %c0_13 = arith.constant 0 : index
    %c1 = arith.constant 1 : index
    %10 = vector.load %arg7[%c0_13, %c1] : memref<4x256xf32, #tpu.memory_space<vmem>>, vector<4x128xf32>
    %c8 = arith.constant 8 : index
    %c0_14 = arith.constant 0 : index
    %11 = vector.load %arg8[%c8, %c0_14] : memref<24x128xf32, #tpu.memory_space<vmem>>, vector<4x128xf32>
    tpu.vector_store %arg8[%c8, %c0_14], %10 {strides = array<i32>} : memref<24x128xf32, #tpu.memory_space<vmem>>, vector<4x128xf32>,
    %cst_15 = arith.constant 0.000000e+00 : f32
    %12 = vector.broadcast %cst_15 : f32 to vector<4x128xf32>
    %c12 = arith.constant 12 : index
    %c0_16 = arith.constant 0 : index
    %13 = vector.load %arg8[%c12, %c0_16] : memref<24x128xf32, #tpu.memory_space<vmem>>, vector<4x128xf32>
    tpu.vector_store %arg8[%c12, %c0_16], %12 {strides = array<i32>} : memref<24x128xf32, #tpu.memory_space<vmem>>, vector<4x128xf32>,
    %c0_17 = arith.constant 0 : index
    %c2 = arith.constant 2 : index
    %14 = vector.load %arg7[%c0_17, %c2] : memref<4x256xf32, #tpu.memory_space<vmem>>, vector<4x128xf32>
    %c16 = arith.constant 16 : index
    %c0_18 = arith.constant 0 : index
    %15 = vector.load %arg8[%c16, %c0_18] : memref<24x128xf32, #tpu.memory_space<vmem>>, vector<4x128xf32>
    tpu.vector_store %arg8[%c16, %c0_18], %14 {strides = array<i32>} : memref<24x128xf32, #tpu.memory_space<vmem>>, vector<4x128xf32>,
    %cst_19 = arith.constant 0.000000e+00 : f32
    %16 = vector.broadcast %cst_19 : f32 to vector<4x128xf32>
    %c20 = arith.constant 20 : index
    %c0_20 = arith.constant 0 : index
    %17 = vector.load %arg8[%c20, %c0_20] : memref<24x128xf32, #tpu.memory_space<vmem>>, vector<4x128xf32>
    tpu.vector_store %arg8[%c20, %c0_20], %16 {strides = array<i32>} : memref<24x128xf32, #tpu.memory_space<vmem>>, vector<4x128xf32>,
    %c0_21 = arith.constant 0 : index
    %c0_22 = arith.constant 0 : index
    %18 = vector.load %arg2[%c0_21, %c0_22] : memref<8x24xf32, #tpu.memory_space<vmem>>, vector<8x24xf32>
    %c0_23 = arith.constant 0 : index
    %c0_24 = arith.constant 0 : index
    %19 = vector.load %arg8[%c0_23, %c0_24] : memref<24x128xf32, #tpu.memory_space<vmem>>, vector<24x128xf32>
    %cst_25 = arith.constant dense<0.000000e+00> : vector<8x128xf32>
    %20 = tpu.matmul %18, %19, %cst_25 {dimension_numbers = #tpu.dot_dimension_numbers<[1], [0], [0], [1], [0, 0, 1, 1], [], []>} : vector<8x24xf32>, vector<24x128xf32>, vector<8x128xf32> -> vector<8x128xf32>
    %c0_26 = arith.constant 0 : index
    %c0_27 = arith.constant 0 : index
    %21 = vector.load %arg3[%c0_26, %c0_27] : memref<8x1xf32, #tpu.memory_space<vmem>>, vector<8x1xf32>
    %22 = vector.broadcast %21 : vector<8x1xf32> to vector<8x128xf32>
    %23 = arith.addf %20, %22 : vector<8x128xf32>
    %c0_28 = arith.constant 0 : index
    %c0_29 = arith.constant 0 : index
    %c0_30 = arith.constant 0 : index
    %24 = vector.load %arg6[%c0_28, %c0_29, %c0_30] : memref<1x8x128xf32, #tpu.memory_space<vmem>>, vector<1x8x128xf32>
    %25 = vector.shape_cast %24 : vector<1x8x128xf32> to vector<8x128xf32>
    %26 = vector.shape_cast %23 : vector<8x128xf32> to vector<1x8x128xf32>
    tpu.vector_store %arg6[%c0_28, %c0_29, %c0_30], %26 {strides = array<i32>} : memref<1x8x128xf32, #tpu.memory_space<vmem>>, vector<1x8x128xf32>,
    return
  }
  func.func @transform_0(%arg0: i32, %arg1: i32) -> (i32, i32) {
    %c0_i32 = arith.constant 0 : i32
    %c0_i32_0 = arith.constant 0 : i32
    %c0_i32_1 = arith.constant 0 : i32
    return %c0_i32, %c0_i32_0 : i32, i32
  }
  func.func @transform_1(%arg0: i32, %arg1: i32) -> (i32, i32) {
    %c0_i32 = arith.constant 0 : i32
    %c0_i32_0 = arith.constant 0 : i32
    %c0_i32_1 = arith.constant 0 : i32
    return %c0_i32, %c0_i32_0 : i32, i32
  }
  func.func @transform_2(%arg0: i32, %arg1: i32) -> (i32, i32, i32) {
    %c0_i32 = arith.constant 0 : i32
    %c0_i32_0 = arith.constant 0 : i32
    return %arg0, %c0_i32, %arg1 : i32, i32, i32
  }
  func.func @transform_3(%arg0: i32, %arg1: i32) -> (i32, i32, i32) {
    %c1_i32 = arith.constant 1 : i32
    %0 = arith.addi %arg1, %c1_i32 : i32
    %c1_i32_0 = arith.constant 1 : i32
    %1 = arith.muli %0, %c1_i32_0 : i32
    %c1_i32_1 = arith.constant 1 : i32
    %2 = arith.minsi %1, %c1_i32_1 : i32
    %c0_i32 = arith.constant 0 : i32
    %c0_i32_2 = arith.constant 0 : i32
    return %arg0, %c0_i32, %2 : i32, i32, i32
  }
  func.func @transform_4(%arg0: i32, %arg1: i32) -> (i32, i32, i32) {
    %c0_i32 = arith.constant 0 : i32
    %c0_i32_0 = arith.constant 0 : i32
    return %arg0, %c0_i32, %arg1 : i32, i32, i32
  }
}

</mosaic_0001>

<llo_original>
// kernel: norm_conv1d.1
$region0: #{norm_conv1d.1}
  #allocation0 [shape = 'u32[]', space=smem, size = 0x4, offset = 0x4, fixed_abs, tag = 'smem constant byte address 0x4 - core index']
  #allocation1 [shape = 'u32[144,128]{1,0:T(1,128)}', space=vmem, size = 0x12000, scoped, tag = 'internal scratch']
  #allocation2 [shape = 'f32[4,256]{1,0:T(4,128)}', space=vmem, size = 0x1000, scoped, tag = 'scratch operand']
  #allocation3 [shape = 'f32[24,128]{1,0:T(8,128)}', space=vmem, size = 0x3000, scoped, tag = 'scratch operand']
  %s0 = inlined_call_operand.vmem [shape: f32[8,24], index: 0, kind: input, shape index: {}]
  %s1 = inlined_call_operand.vmem [shape: f32[8,1], index: 1, kind: input, shape index: {}]
  %s2 = inlined_call_operand.vmem [shape: f32[2,4,256], index: 2, kind: input, shape index: {}, may-alias: {2,3}]
  %s3 = inlined_call_operand.vmem [shape: f32[2,4,256], index: 3, kind: input, shape index: {}, may-alias: {2,3}]
  %s4 = inlined_call_operand.hbm [shape: f32[2,8,128], index: 4, kind: output, shape index: {}]
  %s5 = sld [smem:[#allocation0]]
  $region49: #{norm_conv1d.1} parent=0
    _
  %s7 = ssub.s32 1, %s5
  %s8 = scalar_select 0, %s7, %s5
  $region1: #{norm_conv1d.1} parent=0
    #allocation4 [shape = 'u8[8192]{0}', space=vmem, size = 0x2000, scoped, tag = 'output window, operand 0']
    #allocation5 [shape = 's32[2]{0}', space=sflag, size = 0x8, scoped, tag = 'scoped memory for norm_conv1d.1']
    %9 = vsyncpa [#allocation5], 0
    %s10 = scalar_lea.sflag [#allocation5], 1
    %11 = vsyncpa %s10, 0
    loop: start=0, step=1, limit=4
    $region2: #{norm_conv1d.1} parent=1 // loop_pre_header
      _
    $region3: #{norm_conv1d.1} parent=1 // loop_header
      %s13 = sphi 0, %s17
      %p14 = scmp.ge.s32.totalorder %s13, 4
      %s20 = sphi 0, %s32
      %s21 = sphi 0, %s28
      %s22 = sphi 0, %s20
      %s23 = sphi 0, %s21
      %s24 = sphi 0, %s22
      %s25 = sphi 0, %s23
      %s33 = sphi 0, %s33
      %s35 = sphi 0, %s33
      %s36 = sphi 0, %s35
      %s50 = sphi 0, %s36
      %s54 = sphi 0, %s54
      %s56 = sphi 0, %s54
      %s57 = sphi 0, %s56
      %s71 = sphi 0, %s57
      %s79 = sphi 0, %s81
      %s82 = sphi 0, %s79
      %s83 = sphi 0, %s82
      %s99 = sphi 0, %s83
      %s113 = sphi 0, %s115
      %s116 = sphi 0, %s113
      %s117 = sphi 0, %s116
      %s133 = sphi 0, %s117
      %s141 = sphi 0, %s143
      %s144 = sphi 0, %s141
      %s145 = sphi 0, %s144
      %s161 = sphi 0, %s145
    $region4: #{norm_conv1d.1} parent=1 // loop_header_branch
      %16 = sbr.rel (%p14) target = $region8
    $region5: #{norm_conv1d.1} parent=1 // loop_body
      %s18 = ssub.s32 %s13, 1
      %s19 = ssub.s32 %s13, 2
      %s26 = sadd.s32 1, %s21
      %p27 = scmp.ge.s32.totalorder %s26, 1
      %s28 = scalar_select %p27, 0, %s26
      %s29 = sadd.s32 1, %s20
      %s30 = scalar_select %p27, %s29, %s20
      %p31 = scmp.ge.s32.totalorder %s30, 2
      %s32 = scalar_select %p31, 0, %s30
      %s34 = sadd.s32 %s33, 1
      %p37 = scmp.eq.s32.totalorder %s13, 1
      %p38 = scmp.ne.s32.totalorder %s33, %s35
      %p39 = scmp.eq.s32.totalorder %s13, 0
      %p40 = por %p38, %p39
      %p41 = scmp.ne.s32.totalorder %s33, %s35
      %p42 = scmp.eq.s32.totalorder %s18, 1
      %p43 = por %p41, %p42
      %p44 = scmp.ne.s32.totalorder %s35, %s36
      %p45 = scmp.eq.s32.totalorder %s18, 0
      %p46 = por %p44, %p45
      %p47 = scmp.ne.s32.totalorder %s35, %s36
      %p48 = scmp.eq.s32.totalorder %s19, 1
      %p49 = por %p47, %p48
      %p51 = scmp.ne.s32.totalorder %s36, %s50
      %p52 = scmp.eq.s32.totalorder %s19, 0
      %p53 = por %p51, %p52
      %s55 = sadd.s32 %s54, 1
      %p58 = scmp.eq.s32.totalorder %s13, 1
      %p59 = scmp.ne.s32.totalorder %s54, %s56
      %p60 = scmp.eq.s32.totalorder %s13, 0
      %p61 = por %p59, %p60
      %p62 = scmp.ne.s32.totalorder %s54, %s56
      %p63 = scmp.eq.s32.totalorder %s18, 1
      %p64 = por %p62, %p63
      %p65 = scmp.ne.s32.totalorder %s56, %s57
      %p66 = scmp.eq.s32.totalorder %s18, 0
      %p67 = por %p65, %p66
      %p68 = scmp.ne.s32.totalorder %s56, %s57
      %p69 = scmp.eq.s32.totalorder %s19, 1
      %p70 = por %p68, %p69
      %p72 = scmp.ne.s32.totalorder %s57, %s71
      %p73 = scmp.eq.s32.totalorder %s19, 0
      %p74 = por %p72, %p73
      %s75 = ssub.s32 %s20, %s32
      %s76 = ssub.s32 %s21, %s28
      %s77 = sor.u32 %s75, %s76
      %p78 = scmp.eq.s32.totalorder %s77, 0
      %s80 = sadd.s32 %s79, 1
      %s81 = scalar_select %p78, %s79, %s80
      %p84 = pneg %p78
      %p85 = scmp.eq.s32.totalorder %s13, 1
      %p86 = por %p84, %p85
      %p87 = scmp.ne.s32.totalorder %s79, %s82
      %p88 = scmp.eq.s32.totalorder %s13, 0
      %p89 = por %p87, %p88
      %p90 = scmp.ne.s32.totalorder %s79, %s82
      %p91 = scmp.eq.s32.totalorder %s18, 1
      %p92 = por %p90, %p91
      %p93 = scmp.ne.s32.totalorder %s82, %s83
      %p94 = scmp.eq.s32.totalorder %s18, 0
      %p95 = por %p93, %p94
      %p96 = scmp.ne.s32.totalorder %s82, %s83
      %p97 = scmp.eq.s32.totalorder %s19, 1
      %p98 = por %p96, %p97
      %p100 = scmp.ne.s32.totalorder %s83, %s99
      %p101 = scmp.eq.s32.totalorder %s19, 0
      %p102 = por %p100, %p101
      %s103 = sadd.s32 %s21, 1
      %p104 = scmp.lt.s32.totalorder %s103, 1
      %s105 = scalar_select %p104, %s103, 1
      %s106 = sadd.s32 %s28, 1
      %p107 = scmp.lt.s32.totalorder %s106, 1
      %s108 = scalar_select %p107, %s106, 1
      %s109 = ssub.s32 %s20, %s32
      %s110 = ssub.s32 %s105, %s108
      %s111 = sor.u32 %s109, %s110
      %p112 = scmp.eq.s32.totalorder %s111, 0
      %s114 = sadd.s32 %s113, 1
      %s115 = scalar_select %p112, %s113, %s114
      %p118 = pneg %p112
      %p119 = scmp.eq.s32.totalorder %s13, 1
      %p120 = por %p118, %p119
      %p121 = scmp.ne.s32.totalorder %s113, %s116
      %p122 = scmp.eq.s32.totalorder %s13, 0
      %p123 = por %p121, %p122
      %p124 = scmp.ne.s32.totalorder %s113, %s116
      %p125 = scmp.eq.s32.totalorder %s18, 1
      %p126 = por %p124, %p125
      %p127 = scmp.ne.s32.totalorder %s116, %s117
      %p128 = scmp.eq.s32.totalorder %s18, 0
      %p129 = por %p127, %p128
      %p130 = scmp.ne.s32.totalorder %s116, %s117
      %p131 = scmp.eq.s32.totalorder %s19, 1
      %p132 = por %p130, %p131
      %p134 = scmp.ne.s32.totalorder %s117, %s133
      %p135 = scmp.eq.s32.totalorder %s19, 0
      %p136 = por %p134, %p135
      %s137 = ssub.s32 %s20, %s32
      %s138 = ssub.s32 %s21, %s28
      %s139 = sor.u32 %s137, %s138
      %p140 = scmp.eq.s32.totalorder %s139, 0
      %s142 = sadd.s32 %s141, 1
      %s143 = scalar_select %p140, %s141, %s142
      %p146 = pneg %p140
      %p147 = scmp.eq.s32.totalorder %s13, 1
      %p148 = por %p146, %p147
      %p149 = scmp.ne.s32.totalorder %s141, %s144
      %p150 = scmp.eq.s32.totalorder %s13, 0
      %p151 = por %p149, %p150
      %p152 = scmp.ne.s32.totalorder %s141, %s144
      %p153 = scmp.eq.s32.totalorder %s18, 1
      %p154 = por %p152, %p153
      %p155 = scmp.ne.s32.totalorder %s144, %s145
      %p156 = scmp.eq.s32.totalorder %s18, 0
      %p157 = por %p155, %p156
      %p158 = scmp.ne.s32.totalorder %s144, %s145
      %p159 = scmp.eq.s32.totalorder %s19, 1
      %p160 = por %p158, %p159
      %p162 = scmp.ne.s32.totalorder %s145, %s161
      %p163 = scmp.eq.s32.totalorder %s19, 0
      %p164 = por %p162, %p163
      %p165 = scmp.le.s32.totalorder 1, %s13
      %p166 = scmp.lt.s32.totalorder %s13, 3
      %p167 = pnand %p165, %p166
      %p168 = pneg %p167
      // Predicated region
      $region9: #{norm_conv1d.1} parent=5 // pred_check
        _
      $region10: #{norm_conv1d.1} parent=5 // pred_check_branch
        %170 = sbr.rel (%p167) target = $region12
      $region11: #{norm_conv1d.1} parent=5 // pred_region
        %s171 = ssub.s32 %s13, 1
        // Predicated region
        $region13: #{norm_conv1d.1} parent=11 // pred_check
          %p172 = pneg %p46
        $region14: #{norm_conv1d.1} parent=11 // pred_check_branch
          %174 = sbr.rel (%p172) target = $region16
        $region15: #{norm_conv1d.1} parent=11 // pred_region
          _
        $region16: #{norm_conv1d.1} parent=11 // pred_fallthru
          _
        // Predicated region
        $region17: #{norm_conv1d.1} parent=11 // pred_check
          %p175 = pneg %p67
        $region18: #{norm_conv1d.1} parent=11 // pred_check_branch
          %177 = sbr.rel (%p175) target = $region20
        $region19: #{norm_conv1d.1} parent=11 // pred_region
          _
        $region20: #{norm_conv1d.1} parent=11 // pred_fallthru
          _
      $region12: #{norm_conv1d.1} parent=5 // pred_fallthru
        _
      %p178 = scmp.lt.s32.totalorder %s13, 2
      // Predicated region
      $region21: #{norm_conv1d.1} parent=5 // pred_check
        %p179 = pneg %p178
      $region22: #{norm_conv1d.1} parent=5 // pred_check_branch
        %181 = sbr.rel (%p179) target = $region24
      $region23: #{norm_conv1d.1} parent=5 // pred_region
        // Predicated region
        $region25: #{norm_conv1d.1} parent=23 // pred_check
          %p182 = pneg %p89
        $region26: #{norm_conv1d.1} parent=23 // pred_check_branch
          %184 = sbr.rel (%p182) target = $region28
        $region27: #{norm_conv1d.1} parent=23 // pred_region
          %p185 = scmp.lt.s32.totalorder %s20, 1
          %s186 = scalar_select %p185, %s20, 1
          %p187 = scmp.lt.s32.totalorder %s21, 1
          %s188 = scalar_select %p187, %s21, 1
          %s189 = smul.addr %s186, 2
          %s190 = sadd.s32 %s188, %s189
          %s191 = smul.addr %s190, 4
          %s192 = scalar_lea.vmem %s2, %s191
        $region28: #{norm_conv1d.1} parent=23 // pred_fallthru
          _
        // Predicated region
        $region29: #{norm_conv1d.1} parent=23 // pred_check
          %p193 = pneg %p123
        $region30: #{norm_conv1d.1} parent=23 // pred_check_branch
          %195 = sbr.rel (%p193) target = $region32
        $region31: #{norm_conv1d.1} parent=23 // pred_region
          %s196 = sadd.s32 %s21, 1
          %p197 = scmp.lt.s32.totalorder %s196, 1
          %s198 = scalar_select %p197, %s196, 1
          %p199 = scmp.lt.s32.totalorder %s20, 1
          %s200 = scalar_select %p199, %s20, 1
          %p201 = scmp.lt.s32.totalorder %s198, 1
          %s202 = scalar_select %p201, %s198, 1
          %s203 = smul.addr %s200, 2
          %s204 = sadd.s32 %s202, %s203
          %s205 = smul.addr %s204, 4
          %s206 = scalar_lea.vmem %s3, %s205
          %s207 = sadd.s32 %s21, 1
          %p208 = scmp.lt.s32.totalorder %s207, 1
          %s209 = scalar_select %p208, %s207, 1
        $region32: #{norm_conv1d.1} parent=23 // pred_fallthru
          _
      $region24: #{norm_conv1d.1} parent=5 // pred_fallthru
        _
      %p210 = scmp.le.s32.totalorder 1, %s13
      %p211 = scmp.lt.s32.totalorder %s13, 3
      %p212 = pnand %p210, %p211
      %p213 = pneg %p212
      // Predicated region
      $region33: #{norm_conv1d.1} parent=5 // pred_check
        _
      $region34: #{norm_conv1d.1} parent=5 // pred_check_branch
        %215 = sbr.rel (%p212) target = $region36
      $region35: #{norm_conv1d.1} parent=5 // pred_region
        %s216 = ssub.s32 %s13, 1
        %p217 = pneg %p46
        %p218 = pneg %p43
        %p219 = pneg %p67
        %p220 = pneg %p64
        %p221 = scmp.lt.s32.totalorder %s22, 1
        %s222 = scalar_select %p221, %s22, 1
        %p223 = scmp.lt.s32.totalorder %s23, 1
        %s224 = scalar_select %p223, %s23, 1
        %s225 = smul.addr %s222, 2
        %s226 = sadd.s32 %s224, %s225
        %s227 = smul.addr %s226, 4
        %s228 = scalar_lea.vmem %s2, %s227
        %p229 = pneg %p95
        %p230 = pneg %p92
        %s231 = sadd.s32 %s23, 1
        %p232 = scmp.lt.s32.totalorder %s231, 1
        %s233 = scalar_select %p232, %s231, 1
        %p234 = scmp.lt.s32.totalorder %s22, 1
        %s235 = scalar_select %p234, %s22, 1
        %p236 = scmp.lt.s32.totalorder %s233, 1
        %s237 = scalar_select %p236, %s233, 1
        %s238 = smul.addr %s235, 2
        %s239 = sadd.s32 %s237, %s238
        %s240 = smul.addr %s239, 4
        %s241 = scalar_lea.vmem %s3, %s240
        %p242 = pneg %p129
        %p243 = pneg %p126
        %p244 = pneg %p157
        %p245 = pneg %p154
        %s246 = sand.u32 %s144, 1
        %s247 = scalar_lea.sflag [#allocation5], %s246
        %s248 = sand.u32 %s144, 1
        %s249 = smul.addr %s248, 8
        %s250 = scalar_lea.vmem [#allocation4], %s249
        %p251 = scmp.lt.s32.totalorder %s22, 1
        %s252 = scalar_select %p251, %s22, 1
        %p253 = scmp.lt.s32.totalorder %s23, 1
        %s254 = scalar_select %p253, %s23, 1
        %s255 = smul.addr %s252, 2
        %s256 = sadd.s32 %s254, %s255
        %s257 = smul.addr %s256, 4
        %s258 = scalar_lea.vmem %s2, %s257
        %s259 = sadd.s32 %s23, 1
        %p260 = scmp.lt.s32.totalorder %s259, 1
        %s261 = scalar_select %p260, %s259, 1
        %p262 = scmp.lt.s32.totalorder %s22, 1
        %s263 = scalar_select %p262, %s22, 1
        %p264 = scmp.lt.s32.totalorder %s261, 1
        %s265 = scalar_select %p264, %s261, 1
        %s266 = smul.addr %s263, 2
        %s267 = sadd.s32 %s265, %s266
        %s268 = smul.addr %s267, 4
        %s269 = scalar_lea.vmem %s3, %s268
        %s270 = sadd.s32 %s23, 1
        %p271 = scmp.lt.s32.totalorder %s270, 1
        %s272 = scalar_select %p271, %s270, 1
        %v273 = vld [vmem:[%s258] sm:$0xf]
        %274 = vst [vmem:[#allocation2] sm:$0xf] %v273
        %v275 = vld [vmem:[%s269] sm:$0xf]
        %276 = vst [vmem:[#allocation2 + $0x4] sm:$0xf] %v275
        %v277 = vld [vmem:[#allocation2] sm:$0xf]
        %278 = vst [vmem:[#allocation3] sm:$0xf] %v277
        %279 = vst [vmem:[#allocation3 + $0x4] sm:$0xf] 0.0
        %v280 = vld [vmem:[#allocation2] sm:$0xff]
        %v282 = vcombine.high %v280, %v280
        %283 = vrot.lane.b32.xlu0 %v280, 127
        %v284 = vpop.permute.xlu0 %283
        %285 = vrot.lane.b32.xlu0 %v282, 127
        %v286 = vpop.permute.xlu0 %285
        %vm287 = vcmask 1039360
        %v288 = vsel %vm287, %v284, %v286
        %290 = vst [vmem:[#allocation3 + $0x8] sm:$0xf] %v288
        %291 = vst [vmem:[#allocation3 + $0xc] sm:$0xf] 0.0
        %v292 = vld [vmem:[#allocation2] sm:$0xff]
        %v294 = vcombine.high %v292, %v292
        %295 = vrot.lane.b32.xlu0 %v292, 126
        %v296 = vpop.permute.xlu0 %295
        %297 = vrot.lane.b32.xlu0 %v294, 126
        %v298 = vpop.permute.xlu0 %297
        %vm299 = vcmask 1031168
        %v300 = vsel %vm299, %v296, %v298
        %302 = vst [vmem:[#allocation3 + $0x10] sm:$0xf] %v300
        %303 = vst [vmem:[#allocation3 + $0x14] sm:$0xf] 0.0
        %v304 = vld [vmem:[%s0] sm:$0xff]
        %v305 = vld [vmem:[#allocation3] sm:$0xff]
        %v306 = vld [vmem:[#allocation3 + $0x8] sm:$0xff]
        %v307 = vld [vmem:[#allocation3 + $0x10] sm:$0xff]
        %v308 = vld [vmem:[%s1] sm:$0xff]
        %310 = vset.pattern.permute.xlu0 0
        %311 = vperm.xlu0 %310, %v308
        %v312 = vpop.permute.xlu0 %311
        %vm314 = vcmask 195584
        %v316 = vsel %vm314, %v304, 0
        %318 = vmatprep.subr.mxu0 0.0
        %319 = vmatpush1.msra.mxu0 %v305
        %320 = vmatprep.subr.mxu0 0.0
        %321 = vmatpush1.msra.mxu0 %v306
        %322 = vmatprep.subr.mxu0 0.0
        %323 = vmatpush1.msra.mxu0 %v307
        %324 = vmatprep.subr.mxu0 0.0
        %325 = vmatpush1.msra.mxu0 0.0
        %326 = vmatprep.subr.mxu0 0.0
        %327 = vmatpush1.msra.mxu0 0.0
        %328 = vmatprep.subr.mxu0 0.0
        %329 = vmatpush1.msra.mxu0 0.0
        %330 = vmatprep.subr.mxu0 0.0
        %331 = vmatpush1.msra.mxu0 0.0
        %332 = vmatprep.subr.mxu0 0.0
        %333 = vmatpush1.msra.mxu0 0.0
        %334 = vmatprep.subr.mxu0 0.0
        %335 = vmatpush1.msra.mxu0 0.0
        %336 = vmatprep.subr.mxu0 0.0
        %337 = vmatpush1.msra.mxu0 0.0
        %338 = vmatprep.subr.mxu0 0.0
        %339 = vmatpush1.msra.mxu0 0.0
        %340 = vmatprep.subr.mxu0 0.0
        %341 = vmatpush1.msra.mxu0 0.0
        %342 = vmatprep.subr.mxu0 0.0
        %343 = vmatpush1.msra.mxu0 0.0
        %344 = vmatprep.subr.mxu0 0.0
        %345 = vmatpush1.msra.mxu0 0.0
        %346 = vmatprep.subr.mxu0 0.0
        %347 = vmatpush1.msra.mxu0 0.0
        %348 = vmatprep.subr.mxu0 0.0
        %349 = vmatpush1.msra.mxu0 0.0
        %350 = vmatprep.subr.mxu0 0.0
        %351 = vmatpush1.msra.mxu0 0.0
        %352 = vmatprep.subr.mxu0 0.0
        %353 = vmatpush1.msra.mxu0 0.0
        %354 = vmatprep.subr.mxu0 0.0
        %355 = vmatpush1.msra.mxu0 0.0
        %356 = vmatprep.subr.mxu0 0.0
        %357 = vmatpush1.msra.mxu0 0.0
        %358 = vmatprep.subr.mxu0 0.0
        %359 = vmatpush1.msra.mxu0 0.0
        %360 = vmatprep.subr.mxu0 0.0
        %361 = vmatpush1.msra.mxu0 0.0
        %362 = vmatprep.subr.mxu0 0.0
        %363 = vmatpush1.msra.mxu0 0.0
        %364 = vmatprep.subr.mxu0 0.0
        %365 = vmatpush1.msra.mxu0 0.0
        %366 = vmatprep.subr.mxu0 0.0
        %367 = vmatpush1.msra.mxu0 0.0
        %368 = vmatprep.subr.mxu0 0.0
        %369 = vmatpush1.msra.mxu0 0.0
        %370 = vmatprep.subr.mxu0 0.0
        %371 = vmatpush1.msra.mxu0 0.0
        %372 = vmatprep.subr.mxu0 0.0
        %373 = vmatpush1.msra.mxu0 0.0
        %374 = vmatprep.subr.mxu0 0.0
        %375 = vmatpush1.msra.mxu0 0.0
        %376 = vmatprep.subr.mxu0 0.0
        %377 = vmatpush1.msra.mxu0 0.0
        %378 = vmatprep.subr.mxu0 0.0
        %379 = vmatpush1.msra.mxu0 0.0
        %380 = vmatprep.subr.mxu0 0.0
        %381 = vmatpush1.msra.mxu0 0.0
        %382 = vmatprep.mubr.f32.mxu0 0.0
        %383 = vmatmul.mubr.f32.gmra.mrb[0].mxu0 %v316
        %v384 = vpop.f32.mrb[0].mxu0
        %v385 = vadd.f32 %v312, %v384
        %v386 = vpop.f32.mrb[0].mxu0
        %387 = vdwg.mxu0
        %388 = vst [vmem:[%s250] sm:$0xff] %v385
        %s389 = sand.u32 %s144, 1
        %s390 = scalar_lea.sflag [#allocation5], %s389
        %s391 = sand.u32 %s144, 1
        %s392 = smul.addr %s391, 8
        %s393 = scalar_lea.vmem [#allocation4], %s392
        // Predicated region
        $region37: #{norm_conv1d.1} parent=35 // pred_check
          %p394 = pneg %p154
        $region38: #{norm_conv1d.1} parent=35 // pred_check_branch
          %396 = sbr.rel (%p394) target = $region40
        $region39: #{norm_conv1d.1} parent=35 // pred_region
          %s398 = ssub.s32 128, 128
          %399 = vsyncadd %s390, %s398
          %s400 = sadd.s32 %s23, %s22
          %s401 = smul.addr %s400, 128
          %s402 = scalar_lea.hbm %s4, %s401
          %s404 = sshll.u32 %s393, 4
          %s405 = int_to_ptr.vmem [resolvable:$true] %s404
          %407 = dma.vmem_to_hbm [thread:$0]  %s405, 128, %s402, %s390
        $region40: #{norm_conv1d.1} parent=35 // pred_fallthru
          _
      $region36: #{norm_conv1d.1} parent=5 // pred_fallthru
        _
      %p408 = scmp.le.s32.totalorder 2, %s13
      // Predicated region
      $region41: #{norm_conv1d.1} parent=5 // pred_check
        %p409 = pneg %p408
      $region42: #{norm_conv1d.1} parent=5 // pred_check_branch
        %411 = sbr.rel (%p409) target = $region44
      $region43: #{norm_conv1d.1} parent=5 // pred_region
        %s412 = ssub.s32 %s13, 2
        // Predicated region
        $region45: #{norm_conv1d.1} parent=43 // pred_check
          %p413 = pneg %p160
        $region46: #{norm_conv1d.1} parent=43 // pred_check_branch
          %415 = sbr.rel (%p413) target = $region48
        $region47: #{norm_conv1d.1} parent=43 // pred_region
          %s416 = sand.u32 %s145, 1
          %s417 = scalar_lea.sflag [#allocation5], %s416
          %s418 = sand.u32 %s145, 1
          %s419 = smul.addr %s418, 8
          %s420 = scalar_lea.vmem [#allocation4], %s419
          %421 = dma.done %s417, 128
        $region48: #{norm_conv1d.1} parent=43 // pred_fallthru
          _
      $region44: #{norm_conv1d.1} parent=5 // pred_fallthru
        _
    $region6: #{norm_conv1d.1} parent=1 // loop_footer
      %s17 = sadd.s32 1, %s13
    $region7: #{norm_conv1d.1} parent=1 // loop_footer_branch
      %12 = sbr.rel target = $region3
    $region8: #{norm_conv1d.1} parent=1 // loop_exit
      _
    %422 = vsyncpa [#allocation5], 1
    %s423 = scalar_lea.sflag [#allocation5], 1
    %424 = vsyncpa %s423, 1

</llo_original>
